<compile_context>
chip_gen: v7x
topology: tpu7x:2x2x1
jax: 0.10.0
libtpu: 0.0.40
codegen_flags: <defaults>
</compile_context>

<pallas_src>
import jax
import jax.numpy as jnp
from jax.experimental import pallas as pl
from jax.experimental.pallas import tpu as pltpu

N_FEATS = 32
HIDDEN_DIMS = [16, 10, 6]
N_OUT = 2

TILE_B_MAX = 16384      # max batch columns per grid step (multiple of 128)
_LANE = 128


def _round_up(n, m):
    return ((n + m - 1) // m) * m


def _mlp_kernel(x_ref, w1_ref, b1_ref, w2_ref, b2_ref, w3_ref, b3_ref,
                w4_ref, b4_ref, o_ref):
    """One batch tile of the MLP, batch on the lane (last) dimension after L1.

    x_ref : (tile_b, 32) f32   -- native PyTorch layout, cast to bf16 in-kernel
    wK_ref: (out, in)    bf16  -- PyTorch layout, resident in VMEM across the grid
    bK_ref: (out, 1)     f32   -- broadcast over lanes (batch)
    o_ref : (2,  tile_b) f32   -- logits with batch on lanes (lane-dense store)
    """
    xb = x_ref[...].astype(jnp.bfloat16)                       # (tile_b, 32)
    # W1 (16, 32) x x (tile_b, 32), contracting the feature axis of both:
    # result is (16, tile_b) -> batch lands on lanes; no HBM-side transpose.
    h = jax.lax.dot_general(
        w1_ref[...], xb,
        dimension_numbers=(((1,), (1,)), ((), ())),
        preferred_element_type=jnp.float32) + b1_ref[...]
    h = jnp.maximum(h, 0.0).astype(jnp.bfloat16)
    h = jnp.dot(w2_ref[...], h, preferred_element_type=jnp.float32) + b2_ref[...]
    h = jnp.maximum(h, 0.0).astype(jnp.bfloat16)
    h = jnp.dot(w3_ref[...], h, preferred_element_type=jnp.float32) + b3_ref[...]
    h = jnp.maximum(h, 0.0).astype(jnp.bfloat16)
    h = jnp.dot(w4_ref[...], h, preferred_element_type=jnp.float32) + b4_ref[...]
    o_ref[...] = h


@jax.jit
def binary_classifier_forward(x, params):
    """Pallas forward pass.  x: (B, 32) f32 -> logits (B, 2) f32."""
    B = x.shape[0]

    # Tile the batch so that (a) each step moves enough HBM bytes to amortize
    # the ~0.35 us grid-step overhead and (b) the grid keeps >= 2 steps when B
    # allows it (megacore sharding on v7x).  tile_b is a multiple of 128 unless
    # a single block covers the whole (small) batch exactly.
    tile_b = min(TILE_B_MAX, _round_up(pl.cdiv(B, 2), _LANE))
    if tile_b >= B:
        tile_b = B                      # one full-extent block, no padding
    grid = (pl.cdiv(B, tile_b),)        # ragged last block handled by masking

    w = [params[f"w{i}"].astype(jnp.bfloat16) for i in range(1, 5)]   # (out, in)
    b = [params[f"b{i}"] for i in range(1, 5)]                        # (out, 1) f32

    def resident(p):
        # Full-array block with a constant index map: stays in VMEM across the grid.
        return pl.BlockSpec(p.shape, lambda i: (0, 0))

    out = pl.pallas_call(
        _mlp_kernel,
        out_shape=jax.ShapeDtypeStruct((N_OUT, B), jnp.float32),
        grid=grid,
        in_specs=[pl.BlockSpec((tile_b, N_FEATS), lambda i: (i, 0)),  # x, native layout, read once
                  resident(w[0]), resident(b[0]),
                  resident(w[1]), resident(b[1]),
                  resident(w[2]), resident(b[2]),
                  resident(w[3]), resident(b[3])],
        out_specs=pl.BlockSpec((N_OUT, tile_b), lambda i: (0, i)),    # lane-dense store
        compiler_params=pltpu.CompilerParams(
            dimension_semantics=("parallel",),   # batch tiles shardable over v7x's 2 TCs
            vmem_limit_bytes=32 * 1024 * 1024,   # 2x8 MiB x window + temps; safe on v5e/v6e/v7x
        ),
    )(x, w[0], b[0], w[1], b[1], w[2], b[2], w[3], b[3])

    # (2, B) -> (B, 2): single cheap XLA transpose to keep PyTorch semantics.
    return out.T


def init_params(key):
    """Deterministic init mimicking nn.Linear's uniform(-1/sqrt(fan_in), +).

    Weights are stored in PyTorch (out, in) layout; biases as (out, 1).
    """
    dims = [N_FEATS] + HIDDEN_DIMS + [N_OUT]        # [32, 16, 10, 6, 2]
    params = {}
    for i, (fan_in, fan_out) in enumerate(zip(dims[:-1], dims[1:]), start=1):
        key, kw, kb = jax.random.split(key, 3)
        bound = 1.0 / jnp.sqrt(float(fan_in))
        params[f"w{i}"] = jax.random.uniform(
            kw, (fan_out, fan_in), jnp.float32, -bound, bound)
        params[f"b{i}"] = jax.random.uniform(
            kb, (fan_out, 1), jnp.float32, -bound, bound)
    return params


def reference_forward(x, params):
    """Pure-JAX f32 reference (PyTorch semantics)."""
    h = jnp.maximum(x @ params["w1"].T + params["b1"].T, 0.0)
    h = jnp.maximum(h @ params["w2"].T + params["b2"].T, 0.0)
    h = jnp.maximum(h @ params["w3"].T + params["b3"].T, 0.0)
    return h @ params["w4"].T + params["b4"].T


if __name__ == "__main__":
    key = jax.random.PRNGKey(0)
    key, kx = jax.random.split(key)
    params = init_params(key)

    # Small single-tile case (grid == 1, block == full array dims).
    B = 8
    x = jax.random.normal(kx, (B, N_FEATS), dtype=jnp.float32)
    logits = binary_classifier_forward(x, params)
    jax.block_until_ready(logits)
    ref = reference_forward(x, params)
    assert logits.shape == (B, N_OUT)
    # bf16 matmul inputs (f32 accumulation) -> looser tolerance vs. f32 reference.
    max_err = jnp.max(jnp.abs(logits - ref))
    assert jnp.allclose(logits, ref, atol=3e-2, rtol=3e-2), float(max_err)

    # Multi-tile case with a ragged last block (grid == 2, masked partial writes).
    B2 = 300
    x2 = jax.random.normal(jax.random.PRNGKey(1), (B2, N_FEATS), dtype=jnp.float32)
    logits2 = binary_classifier_forward(x2, params)
    jax.block_until_ready(logits2)
    ref2 = reference_forward(x2, params)
    max_err2 = jnp.max(jnp.abs(logits2 - ref2))
    assert logits2.shape == (B2, N_OUT)
    assert jnp.allclose(logits2, ref2, atol=3e-2, rtol=3e-2), float(max_err2)

    # predict_probs / predict_class equivalents (trivial (B, 2) ops, left to XLA):
    probs = jax.nn.softmax(logits, axis=1)
    classes = jnp.argmax(probs, axis=1)
    jax.block_until_ready((probs, classes))

    print("KERNEL_OK")
</pallas_src>

<mosaic_0001>
module attributes {stable_mosaic.version = 11 : i64} {
  func.func @_mlp_kernel(%arg0: i32, %arg1: memref<8x32xf32, #tpu.memory_space<vmem>>, %arg2: memref<16x32xbf16, #tpu.memory_space<vmem>>, %arg3: memref<16x1xf32, #tpu.memory_space<vmem>>, %arg4: memref<10x16xbf16, #tpu.memory_space<vmem>>, %arg5: memref<10x1xf32, #tpu.memory_space<vmem>>, %arg6: memref<6x10xbf16, #tpu.memory_space<vmem>>, %arg7: memref<6x1xf32, #tpu.memory_space<vmem>>, %arg8: memref<2x6xbf16, #tpu.memory_space<vmem>>, %arg9: memref<2x1xf32, #tpu.memory_space<vmem>>, %arg10: memref<2x8xf32, #tpu.memory_space<vmem>>) attributes {dimension_semantics = [#tpu.dimension_semantics<parallel>], iteration_bounds = array<i64: 1>, scalar_prefetch = 0 : i64, scratch_operands = 0 : i64, tpu.core_type = #tpu.core_type<tc>, window_params = [{transform_indices = @transform_0, window_bounds = array<i64: 8, 32>}, {pipeline_mode = #tpu.pipeline_mode<synchronous>, transform_indices = @transform_1, window_bounds = array<i64: 16, 32>}, {pipeline_mode = #tpu.pipeline_mode<synchronous>, transform_indices = @transform_2, window_bounds = array<i64: 16, 1>}, {pipeline_mode = #tpu.pipeline_mode<synchronous>, transform_indices = @transform_3, window_bounds = array<i64: 10, 16>}, {pipeline_mode = #tpu.pipeline_mode<synchronous>, transform_indices = @transform_4, window_bounds = array<i64: 10, 1>}, {pipeline_mode = #tpu.pipeline_mode<synchronous>, transform_indices = @transform_5, window_bounds = array<i64: 6, 10>}, {pipeline_mode = #tpu.pipeline_mode<synchronous>, transform_indices = @transform_6, window_bounds = array<i64: 6, 1>}, {pipeline_mode = #tpu.pipeline_mode<synchronous>, transform_indices = @transform_7, window_bounds = array<i64: 2, 6>}, {pipeline_mode = #tpu.pipeline_mode<synchronous>, transform_indices = @transform_8, window_bounds = array<i64: 2, 1>}, {transform_indices = @transform_9, window_bounds = array<i64: 2, 8>}]} {
    %c0 = arith.constant 0 : index
    %c0_0 = arith.constant 0 : index
    %0 = vector.load %arg1[%c0, %c0_0] : memref<8x32xf32, #tpu.memory_space<vmem>>, vector<8x32xf32>
    %1 = arith.truncf %0 : vector<8x32xf32> to vector<8x32xbf16>
    %c0_1 = arith.constant 0 : index
    %c0_2 = arith.constant 0 : index
    %2 = vector.load %arg2[%c0_1, %c0_2] : memref<16x32xbf16, #tpu.memory_space<vmem>>, vector<16x32xbf16>
    %cst = arith.constant dense<0.000000e+00> : vector<16x8xf32>
    %3 = tpu.matmul %2, %1, %cst {dimension_numbers = #tpu.dot_dimension_numbers<[1], [1], [0], [0], [0, 0, 1, 0], [], []>} : vector<16x32xbf16>, vector<8x32xbf16>, vector<16x8xf32> -> vector<16x8xf32>
    %c0_3 = arith.constant 0 : index
    %c0_4 = arith.constant 0 : index
    %4 = vector.load %arg3[%c0_3, %c0_4] : memref<16x1xf32, #tpu.memory_space<vmem>>, vector<16x1xf32>
    %5 = vector.broadcast %4 : vector<16x1xf32> to vector<16x8xf32>
    %6 = arith.addf %3, %5 : vector<16x8xf32>
    %cst_5 = arith.constant 0.000000e+00 : f32
    %7 = vector.broadcast %cst_5 : f32 to vector<16x8xf32>
    %8 = arith.maximumf %6, %7 : vector<16x8xf32>
    %9 = arith.truncf %8 : vector<16x8xf32> to vector<16x8xbf16>
    %c0_6 = arith.constant 0 : index
    %c0_7 = arith.constant 0 : index
    %10 = vector.load %arg4[%c0_6, %c0_7] : memref<10x16xbf16, #tpu.memory_space<vmem>>, vector<10x16xbf16>
    %cst_8 = arith.constant dense<0.000000e+00> : vector<10x8xf32>
    %11 = tpu.matmul %10, %9, %cst_8 {dimension_numbers = #tpu.dot_dimension_numbers<[1], [0], [0], [1], [0, 0, 1, 1], [], []>} : vector<10x16xbf16>, vector<16x8xbf16>, vector<10x8xf32> -> vector<10x8xf32>
    %c0_9 = arith.constant 0 : index
    %c0_10 = arith.constant 0 : index
    %12 = vector.load %arg5[%c0_9, %c0_10] : memref<10x1xf32, #tpu.memory_space<vmem>>, vector<10x1xf32>
    %13 = vector.broadcast %12 : vector<10x1xf32> to vector<10x8xf32>
    %14 = arith.addf %11, %13 : vector<10x8xf32>
    %cst_11 = arith.constant 0.000000e+00 : f32
    %15 = vector.broadcast %cst_11 : f32 to vector<10x8xf32>
    %16 = arith.maximumf %14, %15 : vector<10x8xf32>
    %17 = arith.truncf %16 : vector<10x8xf32> to vector<10x8xbf16>
    %c0_12 = arith.constant 0 : index
    %c0_13 = arith.constant 0 : index
    %18 = vector.load %arg6[%c0_12, %c0_13] : memref<6x10xbf16, #tpu.memory_space<vmem>>, vector<6x10xbf16>
    %cst_14 = arith.constant dense<0.000000e+00> : vector<6x8xf32>
    %19 = tpu.matmul %18, %17, %cst_14 {dimension_numbers = #tpu.dot_dimension_numbers<[1], [0], [0], [1], [0, 0, 1, 1], [], []>} : vector<6x10xbf16>, vector<10x8xbf16>, vector<6x8xf32> -> vector<6x8xf32>
    %c0_15 = arith.constant 0 : index
    %c0_16 = arith.constant 0 : index
    %20 = vector.load %arg7[%c0_15, %c0_16] : memref<6x1xf32, #tpu.memory_space<vmem>>, vector<6x1xf32>
    %21 = vector.broadcast %20 : vector<6x1xf32> to vector<6x8xf32>
    %22 = arith.addf %19, %21 : vector<6x8xf32>
    %cst_17 = arith.constant 0.000000e+00 : f32
    %23 = vector.broadcast %cst_17 : f32 to vector<6x8xf32>
    %24 = arith.maximumf %22, %23 : vector<6x8xf32>
    %25 = arith.truncf %24 : vector<6x8xf32> to vector<6x8xbf16>
    %c0_18 = arith.constant 0 : index
    %c0_19 = arith.constant 0 : index
    %26 = vector.load %arg8[%c0_18, %c0_19] : memref<2x6xbf16, #tpu.memory_space<vmem>>, vector<2x6xbf16>
    %cst_20 = arith.constant dense<0.000000e+00> : vector<2x8xf32>
    %27 = tpu.matmul %26, %25, %cst_20 {dimension_numbers = #tpu.dot_dimension_numbers<[1], [0], [0], [1], [0, 0, 1, 1], [], []>} : vector<2x6xbf16>, vector<6x8xbf16>, vector<2x8xf32> -> vector<2x8xf32>
    %c0_21 = arith.constant 0 : index
    %c0_22 = arith.constant 0 : index
    %28 = vector.load %arg9[%c0_21, %c0_22] : memref<2x1xf32, #tpu.memory_space<vmem>>, vector<2x1xf32>
    %29 = vector.broadcast %28 : vector<2x1xf32> to vector<2x8xf32>
    %30 = arith.addf %27, %29 : vector<2x8xf32>
    %c0_23 = arith.constant 0 : index
    %c0_24 = arith.constant 0 : index
    %31 = vector.load %arg10[%c0_23, %c0_24] : memref<2x8xf32, #tpu.memory_space<vmem>>, vector<2x8xf32>
    tpu.vector_store %arg10[%c0_23, %c0_24], %30 {strides = array<i32>} : memref<2x8xf32, #tpu.memory_space<vmem>>, vector<2x8xf32>,
    return
  }
  func.func @transform_0(%arg0: i32) -> (i32, i32) {
    %c0_i32 = arith.constant 0 : i32
    %c0_i32_0 = arith.constant 0 : i32
    return %arg0, %c0_i32 : i32, i32
  }
  func.func @transform_1(%arg0: i32) -> (i32, i32) {
    %c0_i32 = arith.constant 0 : i32
    %c0_i32_0 = arith.constant 0 : i32
    %c0_i32_1 = arith.constant 0 : i32
    return %c0_i32, %c0_i32_0 : i32, i32
  }
  func.func @transform_2(%arg0: i32) -> (i32, i32) {
    %c0_i32 = arith.constant 0 : i32
    %c0_i32_0 = arith.constant 0 : i32
    %c0_i32_1 = arith.constant 0 : i32
    return %c0_i32, %c0_i32_0 : i32, i32
  }
  func.func @transform_3(%arg0: i32) -> (i32, i32) {
    %c0_i32 = arith.constant 0 : i32
    %c0_i32_0 = arith.constant 0 : i32
    %c0_i32_1 = arith.constant 0 : i32
    return %c0_i32, %c0_i32_0 : i32, i32
  }
  func.func @transform_4(%arg0: i32) -> (i32, i32) {
    %c0_i32 = arith.constant 0 : i32
    %c0_i32_0 = arith.constant 0 : i32
    %c0_i32_1 = arith.constant 0 : i32
    return %c0_i32, %c0_i32_0 : i32, i32
  }
  func.func @transform_5(%arg0: i32) -> (i32, i32) {
    %c0_i32 = arith.constant 0 : i32
    %c0_i32_0 = arith.constant 0 : i32
    %c0_i32_1 = arith.constant 0 : i32
    return %c0_i32, %c0_i32_0 : i32, i32
  }
  func.func @transform_6(%arg0: i32) -> (i32, i32) {
    %c0_i32 = arith.constant 0 : i32
    %c0_i32_0 = arith.constant 0 : i32
    %c0_i32_1 = arith.constant 0 : i32
    return %c0_i32, %c0_i32_0 : i32, i32
  }
  func.func @transform_7(%arg0: i32) -> (i32, i32) {
    %c0_i32 = arith.constant 0 : i32
    %c0_i32_0 = arith.constant 0 : i32
    %c0_i32_1 = arith.constant 0 : i32
    return %c0_i32, %c0_i32_0 : i32, i32
  }
  func.func @transform_8(%arg0: i32) -> (i32, i32) {
    %c0_i32 = arith.constant 0 : i32
    %c0_i32_0 = arith.constant 0 : i32
    %c0_i32_1 = arith.constant 0 : i32
    return %c0_i32, %c0_i32_0 : i32, i32
  }
  func.func @transform_9(%arg0: i32) -> (i32, i32) {
    %c0_i32 = arith.constant 0 : i32
    %c0_i32_0 = arith.constant 0 : i32
    return %c0_i32, %arg0 : i32, i32
  }
}

</mosaic_0001>

<llo_original>
// kernel: binary_classifier_forward.1
$region0: #{binary_classifier_forward.1}
  #allocation0 [shape = 'u32[]', space=smem, size = 0x4, offset = 0x4, fixed_abs, tag = 'smem constant byte address 0x4 - core index']
  #allocation1 [shape = 'u32[144,128]{1,0:T(1,128)}', space=vmem, size = 0x12000, scoped, tag = 'internal scratch']
  %s0 = inlined_call_operand.vmem [shape: f32[8,32], index: 0, kind: input, shape index: {}]
  %s1 = inlined_call_operand.vmem [shape: bf16[16,32], index: 1, kind: input, shape index: {}]
  %s2 = inlined_call_operand.vmem [shape: f32[16,1], index: 2, kind: input, shape index: {}]
  %s3 = inlined_call_operand.vmem [shape: bf16[10,16], index: 3, kind: input, shape index: {}]
  %s4 = inlined_call_operand.vmem [shape: f32[10,1], index: 4, kind: input, shape index: {}]
  %s5 = inlined_call_operand.vmem [shape: bf16[6,10], index: 5, kind: input, shape index: {}]
  %s6 = inlined_call_operand.vmem [shape: f32[6,1], index: 6, kind: input, shape index: {}]
  %s7 = inlined_call_operand.vmem [shape: bf16[2,6], index: 7, kind: input, shape index: {}]
  %s8 = inlined_call_operand.vmem [shape: f32[2,1], index: 8, kind: input, shape index: {}]
  %s9 = inlined_call_operand.hbm [shape: f32[2,8], index: 9, kind: output, shape index: {}]
  %s10 = sld [smem:[#allocation0]]
  $region46: #{binary_classifier_forward.1} parent=0
    _
  %s12 = ssub.s32 1, %s10
  %s13 = scalar_select 0, %s12, %s10
  $region1: #{binary_classifier_forward.1} parent=0
    #allocation2 [shape = 'u8[1024]{0}', space=vmem, size = 0x400, scoped, tag = 'output window, operand 0, single buffered']
    #allocation3 [shape = 's32[1]{0}', space=sflag, size = 0x4, scoped, tag = 'scoped memory for binary_classifier_forward.1']
    %14 = vsyncpa [#allocation3], 0
    // Predicated region
    $region2: #{binary_classifier_forward.1} parent=1 // pred_check
      _
    $region3: #{binary_classifier_forward.1} parent=1 // pred_check_branch
      %16 = sbr.rel (0) target = $region5
    $region4: #{binary_classifier_forward.1} parent=1 // pred_region
      _
    $region5: #{binary_classifier_forward.1} parent=1 // pred_fallthru
      _
    // Predicated region
    $region6: #{binary_classifier_forward.1} parent=1 // pred_check
      _
    $region7: #{binary_classifier_forward.1} parent=1 // pred_check_branch
      %18 = sbr.rel (0) target = $region9
    $region8: #{binary_classifier_forward.1} parent=1 // pred_region
      _
    $region9: #{binary_classifier_forward.1} parent=1 // pred_fallthru
      _
    // Predicated region
    $region10: #{binary_classifier_forward.1} parent=1 // pred_check
      _
    $region11: #{binary_classifier_forward.1} parent=1 // pred_check_branch
      %20 = sbr.rel (0) target = $region13
    $region12: #{binary_classifier_forward.1} parent=1 // pred_region
      _
    $region13: #{binary_classifier_forward.1} parent=1 // pred_fallthru
      _
    // Predicated region
    $region14: #{binary_classifier_forward.1} parent=1 // pred_check
      _
    $region15: #{binary_classifier_forward.1} parent=1 // pred_check_branch
      %22 = sbr.rel (0) target = $region17
    $region16: #{binary_classifier_forward.1} parent=1 // pred_region
      _
    $region17: #{binary_classifier_forward.1} parent=1 // pred_fallthru
      _
    // Predicated region
    $region18: #{binary_classifier_forward.1} parent=1 // pred_check
      _
    $region19: #{binary_classifier_forward.1} parent=1 // pred_check_branch
      %24 = sbr.rel (0) target = $region21
    $region20: #{binary_classifier_forward.1} parent=1 // pred_region
      _
    $region21: #{binary_classifier_forward.1} parent=1 // pred_fallthru
      _
    // Predicated region
    $region22: #{binary_classifier_forward.1} parent=1 // pred_check
      _
    $region23: #{binary_classifier_forward.1} parent=1 // pred_check_branch
      %26 = sbr.rel (0) target = $region25
    $region24: #{binary_classifier_forward.1} parent=1 // pred_region
      _
    $region25: #{binary_classifier_forward.1} parent=1 // pred_fallthru
      _
    // Predicated region
    $region26: #{binary_classifier_forward.1} parent=1 // pred_check
      _
    $region27: #{binary_classifier_forward.1} parent=1 // pred_check_branch
      %28 = sbr.rel (0) target = $region29
    $region28: #{binary_classifier_forward.1} parent=1 // pred_region
      _
    $region29: #{binary_classifier_forward.1} parent=1 // pred_fallthru
      _
    // Predicated region
    $region30: #{binary_classifier_forward.1} parent=1 // pred_check
      _
    $region31: #{binary_classifier_forward.1} parent=1 // pred_check_branch
      %30 = sbr.rel (0) target = $region33
    $region32: #{binary_classifier_forward.1} parent=1 // pred_region
      _
    $region33: #{binary_classifier_forward.1} parent=1 // pred_fallthru
      _
    // Predicated region
    $region34: #{binary_classifier_forward.1} parent=1 // pred_check
      _
    $region35: #{binary_classifier_forward.1} parent=1 // pred_check_branch
      %32 = sbr.rel (0) target = $region37
    $region36: #{binary_classifier_forward.1} parent=1 // pred_region
      _
    $region37: #{binary_classifier_forward.1} parent=1 // pred_fallthru
      _
    %v34 = vld [vmem:[%s0] sm:$0xff]
    %v35 = vpack.c.bf16 %v34, %v34
    %v36 = vld [vmem:[%s1] sm:$0xf]
    %v37 = vld [vmem:[%s1 + $0x4] sm:$0xf]
    %v38 = vld [vmem:[%s2] sm:$0xff]
    %v39 = vld [vmem:[%s2 + $0x8] sm:$0xff]
    %41 = vset.pattern.permute.xlu0 0
    %42 = vperm.xlu0 %41, %v38
    %v43 = vpop.permute.xlu0 %42
    %46 = vset.pattern.permute.xlu0 0
    %47 = vperm.xlu0 %46, %v39
    %v48 = vpop.permute.xlu0 %47
    %v52 = vunpack.c.l.b16 %v36
    %v53 = vunpack.c.l.b16 %v37
    %v54 = vpack.c.b16 %v53, %v52
    %vm55 = vcmask 261120
    %v57 = vsel %vm55, %v54, 0
    %v60 = vsel %vm55, %v35, 0
    %62 = vmatprep.subr.bf16.mxu0 0
    %63 = vmatpush1.bf16.xpose.msra.mxu0 %v60
    %64 = vmatprep.subr.bf16.mxu0 0
    %65 = vmatpush1.bf16.xpose.msra.mxu0 0
    %66 = vmatprep.subr.bf16.mxu0 0
    %67 = vmatpush1.bf16.xpose.msra.mxu0 0
    %68 = vmatprep.subr.bf16.mxu0 0
    %69 = vmatpush1.bf16.xpose.msra.mxu0 0
    %70 = vmatprep.subr.bf16.mxu0 0
    %71 = vmatpush1.bf16.xpose.msra.mxu0 0
    %72 = vmatprep.subr.bf16.mxu0 0
    %73 = vmatpush1.bf16.xpose.msra.mxu0 0
    %74 = vmatprep.subr.bf16.mxu0 0
    %75 = vmatpush1.bf16.xpose.msra.mxu0 0
    %76 = vmatprep.subr.bf16.mxu0 0
    %77 = vmatpush1.bf16.xpose.msra.mxu0 0
    %78 = vmatprep.subr.bf16.mxu0 0
    %79 = vmatpush1.bf16.xpose.msra.mxu0 0
    %80 = vmatprep.subr.bf16.mxu0 0
    %81 = vmatpush1.bf16.xpose.msra.mxu0 0
    %82 = vmatprep.subr.bf16.mxu0 0
    %83 = vmatpush1.bf16.xpose.msra.mxu0 0
    %84 = vmatprep.subr.bf16.mxu0 0
    %85 = vmatpush1.bf16.xpose.msra.mxu0 0
    %86 = vmatprep.subr.bf16.mxu0 0
    %87 = vmatpush1.bf16.xpose.msra.mxu0 0
    %88 = vmatprep.subr.bf16.mxu0 0
    %89 = vmatpush1.bf16.xpose.msra.mxu0 0
    %90 = vmatprep.subr.bf16.mxu0 0
    %91 = vmatpush1.bf16.xpose.msra.mxu0 0
    %92 = vmatprep.subr.bf16.mxu0 0
    %93 = vmatpush1.bf16.xpose.msra.mxu0 0
    %94 = vmatprep.mubr.bf16.mxu0 0
    %95 = vmatmul.mubr.bf16.gmra.mrb[0].mxu0 %v57
    %v96 = vpop.f32.mrb[0].mxu0
    %v97 = vadd.f32 %v43, %v96
    %v98 = vpop.f32.mrb[0].mxu0
    %v99 = vpop.f32.mrb[0].mxu0
    %v100 = vadd.f32 %v48, %v99
    %v101 = vpop.f32.mrb[0].mxu0
    %102 = vdwg.mxu0
    %v103 = vmax.f32 %v97, 0.0
    %v104 = vmax.f32 %v100, 0.0
    %v105 = vpack.c.bf16 %v104, %v103
    %v106 = vld [vmem:[%s3] sm:$0xf]
    %v107 = vld [vmem:[%s3 + $0x4] sm:$0x1]
    %v108 = vld [vmem:[%s4] sm:$0xff]
    %v109 = vld [vmem:[%s4 + $0x8] sm:$0x3]
    %111 = vset.pattern.permute.xlu0 0
    %112 = vperm.xlu0 %111, %v108
    %v113 = vpop.permute.xlu0 %112
    %116 = vset.pattern.permute.xlu0 0
    %117 = vperm.xlu0 %116, %v109
    %v118 = vpop.permute.xlu0 %117
    %v122 = vunpack.c.l.b16 %v106
    %v123 = vunpack.c.l.b16 %v107
    %v124 = vpack.c.b16 %v123, %v122
    %vm125 = vcmask 130048
    %v127 = vsel %vm125, %v124, 0
    %129 = vmatprep.subr.bf16.mxu0 0
    %130 = vmatpush1.bf16.msra.mxu0 %v105
    %131 = vmatprep.subr.bf16.mxu0 0
    %132 = vmatpush1.bf16.msra.mxu0 0
    %133 = vmatprep.subr.bf16.mxu0 0
    %134 = vmatpush1.bf16.msra.mxu0 0
    %135 = vmatprep.subr.bf16.mxu0 0
    %136 = vmatpush1.bf16.msra.mxu0 0
    %137 = vmatprep.subr.bf16.mxu0 0
    %138 = vmatpush1.bf16.msra.mxu0 0
    %139 = vmatprep.subr.bf16.mxu0 0
    %140 = vmatpush1.bf16.msra.mxu0 0
    %141 = vmatprep.subr.bf16.mxu0 0
    %142 = vmatpush1.bf16.msra.mxu0 0
    %143 = vmatprep.subr.bf16.mxu0 0
    %144 = vmatpush1.bf16.msra.mxu0 0
    %145 = vmatprep.subr.bf16.mxu0 0
    %146 = vmatpush1.bf16.msra.mxu0 0
    %147 = vmatprep.subr.bf16.mxu0 0
    %148 = vmatpush1.bf16.msra.mxu0 0
    %149 = vmatprep.subr.bf16.mxu0 0
    %150 = vmatpush1.bf16.msra.mxu0 0
    %151 = vmatprep.subr.bf16.mxu0 0
    %152 = vmatpush1.bf16.msra.mxu0 0
    %153 = vmatprep.subr.bf16.mxu0 0
    %154 = vmatpush1.bf16.msra.mxu0 0
    %155 = vmatprep.subr.bf16.mxu0 0
    %156 = vmatpush1.bf16.msra.mxu0 0
    %157 = vmatprep.subr.bf16.mxu0 0
    %158 = vmatpush1.bf16.msra.mxu0 0
    %159 = vmatprep.subr.bf16.mxu0 0
    %160 = vmatpush1.bf16.msra.mxu0 0
    %161 = vmatprep.mubr.bf16.mxu0 0
    %162 = vmatmul.mubr.bf16.gmra.mrb[0].mxu0 %v127
    %v163 = vpop.f32.mrb[0].mxu0
    %v164 = vadd.f32 %v113, %v163
    %v165 = vpop.f32.mrb[0].mxu0
    %v166 = vpop.f32.mrb[0].mxu0
    %v167 = vadd.f32 %v118, %v166
    %v168 = vpop.f32.mrb[0].mxu0
    %169 = vdwg.mxu0
    %v170 = vmax.f32 %v164, 0.0
    %v171 = vmax.f32 %v167, 0.0
    %v172 = vpack.c.bf16 %v171, %v170
    %v173 = vld [vmem:[%s5] sm:$0x7]
    %v174 = vld [vmem:[%s6] sm:$0x3f]
    %176 = vset.pattern.permute.xlu0 0
    %177 = vperm.xlu0 %176, %v174
    %v178 = vpop.permute.xlu0 %177
    %vm180 = vcmask 80896
    %v182 = vsel %vm180, %v173, 0
    %vm184 = vcmask 1044480
    %v186 = vsel %vm184, %v172, 0
    %188 = vmatprep.subr.bf16.mxu0 0
    %189 = vmatpush1.bf16.msra.mxu0 %v186
    %190 = vmatprep.subr.bf16.mxu0 0
    %191 = vmatpush1.bf16.msra.mxu0 0
    %192 = vmatprep.subr.bf16.mxu0 0
    %193 = vmatpush1.bf16.msra.mxu0 0
    %194 = vmatprep.subr.bf16.mxu0 0
    %195 = vmatpush1.bf16.msra.mxu0 0
    %196 = vmatprep.subr.bf16.mxu0 0
    %197 = vmatpush1.bf16.msra.mxu0 0
    %198 = vmatprep.subr.bf16.mxu0 0
    %199 = vmatpush1.bf16.msra.mxu0 0
    %200 = vmatprep.subr.bf16.mxu0 0
    %201 = vmatpush1.bf16.msra.mxu0 0
    %202 = vmatprep.subr.bf16.mxu0 0
    %203 = vmatpush1.bf16.msra.mxu0 0
    %204 = vmatprep.subr.bf16.mxu0 0
    %205 = vmatpush1.bf16.msra.mxu0 0
    %206 = vmatprep.subr.bf16.mxu0 0
    %207 = vmatpush1.bf16.msra.mxu0 0
    %208 = vmatprep.subr.bf16.mxu0 0
    %209 = vmatpush1.bf16.msra.mxu0 0
    %210 = vmatprep.subr.bf16.mxu0 0
    %211 = vmatpush1.bf16.msra.mxu0 0
    %212 = vmatprep.subr.bf16.mxu0 0
    %213 = vmatpush1.bf16.msra.mxu0 0
    %214 = vmatprep.subr.bf16.mxu0 0
    %215 = vmatpush1.bf16.msra.mxu0 0
    %216 = vmatprep.subr.bf16.mxu0 0
    %217 = vmatpush1.bf16.msra.mxu0 0
    %218 = vmatprep.subr.bf16.mxu0 0
    %219 = vmatpush1.bf16.msra.mxu0 0
    %220 = vmatprep.mubr.bf16.mxu0 0
    %221 = vmatmul.mubr.bf16.gmra.mrb[0].mxu0 %v182
    %v222 = vpop.f32.mrb[0].mxu0
    %v223 = vadd.f32 %v178, %v222
    %v224 = vpop.f32.mrb[0].mxu0
    %v225 = vpop.f32.mrb[0].mxu0
    %v226 = vpop.f32.mrb[0].mxu0
    %227 = vdwg.mxu0
    %v228 = vmax.f32 %v223, 0.0
    %v229 = vpack.c.bf16 %v228, %v228
    %v230 = vld [vmem:[%s7] sm:$0x1]
    %v231 = vld [vmem:[%s8] sm:$0x3]
    %233 = vset.pattern.permute.xlu0 0
    %234 = vperm.xlu0 %233, %v231
    %v235 = vpop.permute.xlu0 %234
    %vm237 = vcmask 48128
    %v239 = vsel %vm237, %v230, 0
    %vm241 = vcmask 1042432
    %v243 = vsel %vm241, %v229, 0
    %245 = vmatprep.subr.bf16.mxu0 0
    %246 = vmatpush1.bf16.msra.mxu0 %v243
    %247 = vmatprep.subr.bf16.mxu0 0
    %248 = vmatpush1.bf16.msra.mxu0 0
    %249 = vmatprep.subr.bf16.mxu0 0
    %250 = vmatpush1.bf16.msra.mxu0 0
    %251 = vmatprep.subr.bf16.mxu0 0
    %252 = vmatpush1.bf16.msra.mxu0 0
    %253 = vmatprep.subr.bf16.mxu0 0
    %254 = vmatpush1.bf16.msra.mxu0 0
    %255 = vmatprep.subr.bf16.mxu0 0
    %256 = vmatpush1.bf16.msra.mxu0 0
    %257 = vmatprep.subr.bf16.mxu0 0
    %258 = vmatpush1.bf16.msra.mxu0 0
    %259 = vmatprep.subr.bf16.mxu0 0
    %260 = vmatpush1.bf16.msra.mxu0 0
    %261 = vmatprep.subr.bf16.mxu0 0
    %262 = vmatpush1.bf16.msra.mxu0 0
    %263 = vmatprep.subr.bf16.mxu0 0
    %264 = vmatpush1.bf16.msra.mxu0 0
    %265 = vmatprep.subr.bf16.mxu0 0
    %266 = vmatpush1.bf16.msra.mxu0 0
    %267 = vmatprep.subr.bf16.mxu0 0
    %268 = vmatpush1.bf16.msra.mxu0 0
    %269 = vmatprep.subr.bf16.mxu0 0
    %270 = vmatpush1.bf16.msra.mxu0 0
    %271 = vmatprep.subr.bf16.mxu0 0
    %272 = vmatpush1.bf16.msra.mxu0 0
    %273 = vmatprep.subr.bf16.mxu0 0
    %274 = vmatpush1.bf16.msra.mxu0 0
    %275 = vmatprep.subr.bf16.mxu0 0
    %276 = vmatpush1.bf16.msra.mxu0 0
    %277 = vmatprep.mubr.bf16.mxu0 0
    %278 = vmatmul.mubr.bf16.gmra.mrb[0].mxu0 %v239
    %v279 = vpop.f32.mrb[0].mxu0
    %v280 = vadd.f32 %v235, %v279
    %v281 = vpop.f32.mrb[0].mxu0
    %v282 = vpop.f32.mrb[0].mxu0
    %v283 = vpop.f32.mrb[0].mxu0
    %284 = vdwg.mxu0
    %vm285 = vcmask 58368
    %286 = vst.msk [vmem:[#allocation2] sm:$0x3] %vm285, %v280
    // Predicated region
    $region38: #{binary_classifier_forward.1} parent=1 // pred_check
      _
    $region39: #{binary_classifier_forward.1} parent=1 // pred_check_branch
      %288 = sbr.rel (0) target = $region41
    $region40: #{binary_classifier_forward.1} parent=1 // pred_region
      %s290 = ssub.s32 32, 32
      %291 = vsyncadd [#allocation3], %s290
      %s293 = sshll.u32 [#allocation2], 4
      %s294 = int_to_ptr.vmem [resolvable:$true] %s293
      %296 = dma.vmem_to_hbm [thread:$0]  %s294, 32, %s9, [#allocation3]
    $region41: #{binary_classifier_forward.1} parent=1 // pred_fallthru
      _
    // Predicated region
    $region42: #{binary_classifier_forward.1} parent=1 // pred_check
      _
    $region43: #{binary_classifier_forward.1} parent=1 // pred_check_branch
      %298 = sbr.rel (0) target = $region45
    $region44: #{binary_classifier_forward.1} parent=1 // pred_region
      %299 = dma.done [#allocation3], 32
    $region45: #{binary_classifier_forward.1} parent=1 // pred_fallthru
      _
    %300 = vsyncpa [#allocation3], 1

</llo_original>
